<compile_context>
chip_gen: v7x
topology: tpu7x:2x2x1
jax: 0.10.0
libtpu: 0.0.40
codegen_flags: <defaults>
</compile_context>

<pallas_src>
from functools import partial

import jax
import jax.numpy as jnp
from jax import lax
from jax.experimental import pallas as pl
from jax.experimental.pallas import tpu as pltpu


def _round_up(v, m):
    return ((v + m - 1) // m) * m


def _club_kernel(x_ref, y_ref, ey_ref, vary_ref,
                 w1_ref, b1_ref, w2_ref, b2_ref,
                 o_ref, acc_ref, *, n_valid, tiles_per_core, need_mask):
    c = pl.program_id(0)            # partial-sum index ("parallel" -> per TC on v7x)
    t = pl.program_id(1)            # tile index within this partial ("arbitrary")

    @pl.when(t == 0)
    def _init():
        acc_ref[...] = jnp.zeros_like(acc_ref)

    tile_n = x_ref.shape[0]
    y_pad = y_ref.shape[1]

    x = x_ref[...]                  # [T, x_dim]   (f32 or bf16)
    y = y_ref[...]                  # [T, y_pad]   f32, zero-padded columns
    ey = ey_ref[...]                # [1, y_pad]   E[y]
    vary = vary_ref[...]            # [1, y_pad]   Var[y]

    # Fused first layer (both branches share LHS x): x @ [W1_mu | W1_logvar]
    h = jnp.dot(x, w1_ref[...], preferred_element_type=jnp.float32) + b1_ref[...]
    h = jnp.maximum(h, 0.0)                                         # [T, 2*h2] f32

    # Fused block-diagonal second layer -> [mu | pre_tanh_logvar]; y_pad is a
    # multiple of 128 so the split below is lane-tile aligned (free slices).
    z = jnp.dot(h.astype(w2_ref.dtype), w2_ref[...],
                preferred_element_type=jnp.float32) + b2_ref[...]   # [T, 2*y_pad]
    mu = z[:, :y_pad]
    logvar = jnp.tanh(z[:, y_pad:])
    inv_var = jnp.exp(-logvar)

    # Centered closed-form (positive - negative), WITHOUT the -0.5 factor
    # (folded into the wrapper epilogue):
    #   contrib = inv_var * (t^2 - Var[y] - 2*(mu - E[y])*t),   t = y - E[y]
    tc = y - ey
    mc = mu - ey
    contrib = inv_var * (tc * (tc - 2.0 * mc) - vary)               # [T, y_pad]

    def _accumulate(v):
        # Sublane-tile preserving reduce [T, y_pad] -> [8, y_pad]: pure VPU adds,
        # no per-step XLU lane reduce, no narrow (1,1) store in the steady state.
        acc_ref[...] += jnp.sum(v.reshape(tile_n // 8, 8, y_pad), axis=0)

    gtile = c * tiles_per_core + t
    if need_mask:
        boundary = n_valid // tile_n   # first global tile that can contain rows >= n
        @pl.when(gtile < boundary)
        def _():
            _accumulate(contrib)

        @pl.when(gtile >= boundary)
        def _():
            row = gtile * tile_n + lax.broadcasted_iota(jnp.int32, (tile_n, 1), 0)
            _accumulate(jnp.where(row < n_valid, contrib, 0.0))
    else:
        _accumulate(contrib)

    @pl.when(t == pl.num_programs(1) - 1)
    def _finalize():
        o_ref[0] = acc_ref[...]        # lane-dense (8, y_pad) per-partial output


def club_forward(x, y, params, *, tile_n=None, dot_dtype=jnp.float32, num_partials=2):
    """CLUB.forward(x_samples, y_samples).

    params: dict with w1m, b1m, w2m, b2m, w1v, b1v, w2v, b2v
            (weights [in, out], biases [1, out]).
    dot_dtype: MXU operand dtype.  bf16 is recommended on v5e/v6e/v7x (the MXU is
               natively bf16 and it halves HBM streaming); accumulation stays f32.
    num_partials: number of per-core partial sums (2 shards the sample axis across
               both TensorCores on v7x; harmless serial split on v5e/v6e).
    """
    n, x_dim = x.shape
    _, y_dim = y.shape
    h2 = params["w2m"].shape[0]
    dsz = jnp.dtype(dot_dtype).itemsize
    y_pad = max(128, _round_up(y_dim, 128))

    # Column statistics of y for the closed-form negative term (centered form
    # for f32 conditioning when y is not standardized).
    yf = y.astype(jnp.float32)
    ey = jnp.mean(yf, axis=0, keepdims=True)                       # [1, y_dim]
    vary = jnp.mean((yf - ey) ** 2, axis=0, keepdims=True)         # [1, y_dim]

    def pad_cols(a):
        return a if y_pad == y_dim else jnp.pad(a, ((0, 0), (0, y_pad - y_dim)))

    ey = pad_cols(ey)
    vary = pad_cols(vary)

    # Fused first-layer weight [x_dim, 2*h2] and bias [1, 2*h2].
    w1 = jnp.concatenate([params["w1m"], params["w1v"]], axis=1).astype(dot_dtype)
    b1 = jnp.concatenate([params["b1m"], params["b1v"]], axis=1).astype(jnp.float32)

    # Fused block-diagonal second-layer weight [2*h2, 2*y_pad] and bias [1, 2*y_pad].
    # TODO(synk): when y_pad reaches the MXU width (128 on v5e, 256 on v6e/v7x), drop
    # the zero block-diagonal and run two second-layer dots instead (halves the second
    # matmul's MXU work and W2's VMEM footprint).
    zeros = jnp.zeros((h2, y_pad), jnp.float32)
    w2 = jnp.concatenate(
        [jnp.concatenate([pad_cols(params["w2m"]), zeros], axis=1),
         jnp.concatenate([zeros, pad_cols(params["w2v"])], axis=1)],
        axis=0).astype(dot_dtype)
    b2 = jnp.concatenate([pad_cols(params["b2m"]), pad_cols(params["b2v"])],
                         axis=1).astype(jnp.float32)

    x_in = x.astype(dot_dtype)
    y_in = pad_cols(yf)

    # No sample-axis pad copy; only a degenerate tiny-batch pad up to one sublane tile.
    n_rows = n
    if n_rows < 8:
        x_in = jnp.pad(x_in, ((0, 8 - n_rows), (0, 0)))
        y_in = jnp.pad(y_in, ((0, 8 - n_rows), (0, 0)))
        n_rows = 8

    # --- VMEM-budget-driven tile size + explicit vmem limit ---------------------
    def vmem_bytes(tn):
        return (2 * tn * (x_dim * dsz + y_pad * 4)                   # x/y, 2 buffers
                + 2 * (x_dim * 2 * h2 + 2 * h2 * 2 * y_pad) * dsz    # resident weights
                + (2 * h2 + 4 * y_pad) * 4                           # biases + stats
                + tn * (2 * h2 + 4 * y_pad) * 4                      # h, z, contrib temps
                + 8 * y_pad * 4)                                     # accumulator scratch

    if tile_n is None:
        row_bytes = x_dim * dsz + y_pad * 4
        tile_n = max(256, min(2048, (4 << 20) // max(row_bytes, 1)))
    tile_n = max(8, _round_up(int(tile_n), 8))
    tile_n = min(tile_n, (n_rows // 8) * 8)        # never exceed the array extent
    if dsz == 2 and tile_n >= 16:
        tile_n = (tile_n // 16) * 16               # bf16 packs 2 rows per sublane
    while tile_n > 128 and vmem_bytes(tile_n) > (28 << 20):
        tile_n = _round_up(tile_n // 2, 16 if dsz == 2 else 8)

    n_tiles = -(-n_rows // tile_n)
    num_partials = max(1, min(int(num_partials), n_tiles))
    tiles_per_core = -(-n_tiles // num_partials)
    covered = num_partials * tiles_per_core * tile_n
    need_mask = covered != n

    # Clamp the block index so over-shot tiles (ragged / dual-core overshoot) never
    # DMA out of bounds; their rows are zeroed by the in-kernel mask.
    def row_map(c, t):
        return (jnp.minimum(c * tiles_per_core + t, n_tiles - 1), 0)

    vmem_limit = int(min(48 << 20, max(32 << 20, 2 * vmem_bytes(tile_n))))

    out = pl.pallas_call(
        partial(_club_kernel, n_valid=n, tiles_per_core=tiles_per_core,
                need_mask=need_mask),
        out_shape=jax.ShapeDtypeStruct((num_partials, 8, y_pad), jnp.float32),
        grid_spec=pltpu.PrefetchScalarGridSpec(
            num_scalar_prefetch=0,
            grid=(num_partials, tiles_per_core),
            in_specs=[
                pl.BlockSpec((tile_n, x_dim), row_map),               # x tile
                pl.BlockSpec((tile_n, y_pad), row_map),               # y tile
                pl.BlockSpec((1, y_pad), lambda c, t: (0, 0)),        # E[y]   (resident)
                pl.BlockSpec((1, y_pad), lambda c, t: (0, 0)),        # Var[y] (resident)
                pl.BlockSpec((x_dim, 2 * h2), lambda c, t: (0, 0)),   # fused W1
                pl.BlockSpec((1, 2 * h2), lambda c, t: (0, 0)),       # fused b1
                pl.BlockSpec((2 * h2, 2 * y_pad), lambda c, t: (0, 0)),  # fused W2
                pl.BlockSpec((1, 2 * y_pad), lambda c, t: (0, 0)),    # fused b2
            ],
            out_specs=pl.BlockSpec((1, 8, y_pad), lambda c, t: (c, 0, 0)),
            scratch_shapes=[pltpu.VMEM((8, y_pad), jnp.float32)],     # per-core accum
        ),
        compiler_params=pltpu.CompilerParams(
            dimension_semantics=("parallel", "arbitrary"),
            vmem_limit_bytes=vmem_limit),
    )(x_in, y_in, ey, vary, w1, b1, w2, b2)

    # Epilogue: reduce per-partial / per-lane sums (tiny), fold -0.5 and 1/n.
    return jnp.sum(out) * (-0.5 / n)


def init_club_params(key, x_dim, y_dim, hidden_size):
    h2 = hidden_size // 2
    ks = jax.random.split(key, 8)

    def lin(kw, kb, fan_in, fan_out):
        bound = 1.0 / jnp.sqrt(fan_in)
        w = jax.random.uniform(kw, (fan_in, fan_out), jnp.float32, -bound, bound)
        b = jax.random.uniform(kb, (1, fan_out), jnp.float32, -bound, bound)
        return w, b

    w1m, b1m = lin(ks[0], ks[1], x_dim, h2)
    w2m, b2m = lin(ks[2], ks[3], h2, y_dim)
    w1v, b1v = lin(ks[4], ks[5], x_dim, h2)
    w2v, b2v = lin(ks[6], ks[7], h2, y_dim)
    return dict(w1m=w1m, b1m=b1m, w2m=w2m, b2m=b2m,
                w1v=w1v, b1v=b1v, w2v=w2v, b2v=b2v)


def club_forward_ref(x, y, p, dot_dtype=jnp.float32):
    """Pure-JAX mirror of the PyTorch forward (brute-force O(N^2) negative term)."""
    def lin(v, w, b):
        return jnp.dot(v.astype(dot_dtype), w.astype(dot_dtype),
                       preferred_element_type=jnp.float32) + b

    h_mu = jnp.maximum(lin(x, p["w1m"], p["b1m"]), 0.0)
    mu = lin(h_mu, p["w2m"], p["b2m"])
    h_lv = jnp.maximum(lin(x, p["w1v"], p["b1v"]), 0.0)
    logvar = jnp.tanh(lin(h_lv, p["w2v"], p["b2v"]))

    positive = -((mu - y) ** 2) / 2.0 / jnp.exp(logvar)
    negative = -jnp.mean((y[None, :, :] - mu[:, None, :]) ** 2, axis=1) / 2.0 / jnp.exp(logvar)
    return jnp.mean(jnp.sum(positive, -1) - jnp.sum(negative, -1))


if __name__ == "__main__":
    N, x_dim, y_dim, hidden = 8, 32, 16, 32

    key = jax.random.PRNGKey(0)
    k_x, k_y, k_p = jax.random.split(key, 3)
    x = jax.random.normal(k_x, (N, x_dim), jnp.float32)
    y = jax.random.normal(k_y, (N, y_dim), jnp.float32)
    params = init_club_params(k_p, x_dim, y_dim, hidden)

    # f32 MXU path: must match the PyTorch-equivalent reference tightly.
    out_f32 = jax.block_until_ready(club_forward(x, y, params))
    ref_f32 = club_forward_ref(x, y, params)
    assert jnp.allclose(out_f32, ref_f32, atol=1e-4, rtol=1e-4), (out_f32, ref_f32)

    # bf16 MXU path (recommended on v5e/v6e/v7x) vs. a precision-matched reference.
    out_bf16 = jax.block_until_ready(club_forward(x, y, params, dot_dtype=jnp.bfloat16))
    ref_bf16 = club_forward_ref(x, y, params, dot_dtype=jnp.bfloat16)
    assert jnp.allclose(out_bf16, ref_bf16, atol=1e-3, rtol=1e-3), (out_bf16, ref_bf16)

    # Ragged N, multi-tile, 2-partial grid: exercises the boundary mask, the fully
    # out-of-range trailing tile (clamped DMA + masked), and the wrapper reduction.
    N2 = 40
    x2 = jax.random.normal(jax.random.PRNGKey(1), (N2, x_dim), jnp.float32)
    y2 = jax.random.normal(jax.random.PRNGKey(2), (N2, y_dim), jnp.float32)
    out2 = jax.block_until_ready(club_forward(x2, y2, params, tile_n=16))
    ref2 = club_forward_ref(x2, y2, params)
    assert jnp.allclose(out2, ref2, atol=1e-3, rtol=1e-3), (out2, ref2)

    print("KERNEL_OK")
</pallas_src>

<mosaic_0001>
module attributes {stable_mosaic.version = 11 : i64} {
  func.func @_club_kernel(%arg0: i32, %arg1: i32, %arg2: memref<8x32xf32, #tpu.memory_space<vmem>>, %arg3: memref<8x128xf32, #tpu.memory_space<vmem>>, %arg4: memref<1x128xf32, #tpu.memory_space<vmem>>, %arg5: memref<1x128xf32, #tpu.memory_space<vmem>>, %arg6: memref<32x32xf32, #tpu.memory_space<vmem>>, %arg7: memref<1x32xf32, #tpu.memory_space<vmem>>, %arg8: memref<32x256xf32, #tpu.memory_space<vmem>>, %arg9: memref<1x256xf32, #tpu.memory_space<vmem>>, %arg10: memref<1x8x128xf32, #tpu.memory_space<vmem>>, %arg11: memref<8x128xf32, #tpu.memory_space<vmem>>) attributes {dimension_semantics = [#tpu.dimension_semantics<parallel>, #tpu.dimension_semantics<arbitrary>], iteration_bounds = array<i64: 1, 1>, scalar_prefetch = 0 : i64, scratch_operands = 1 : i64, tpu.core_type = #tpu.core_type<tc>, window_params = [{transform_indices = @transform_0, window_bounds = array<i64: 8, 32>}, {transform_indices = @transform_1, window_bounds = array<i64: 8, 128>}, {pipeline_mode = #tpu.pipeline_mode<synchronous>, transform_indices = @transform_2, window_bounds = array<i64: 1, 128>}, {pipeline_mode = #tpu.pipeline_mode<synchronous>, transform_indices = @transform_3, window_bounds = array<i64: 1, 128>}, {pipeline_mode = #tpu.pipeline_mode<synchronous>, transform_indices = @transform_4, window_bounds = array<i64: 32, 32>}, {pipeline_mode = #tpu.pipeline_mode<synchronous>, transform_indices = @transform_5, window_bounds = array<i64: 1, 32>}, {pipeline_mode = #tpu.pipeline_mode<synchronous>, transform_indices = @transform_6, window_bounds = array<i64: 32, 256>}, {pipeline_mode = #tpu.pipeline_mode<synchronous>, transform_indices = @transform_7, window_bounds = array<i64: 1, 256>}, {transform_indices = @transform_8, window_bounds = array<i64: 1, 8, 128>}]} {
    %c0_i32 = arith.constant 0 : i32
    %0 = arith.cmpi eq, %arg1, %c0_i32 : i32
    %1 = arith.extui %0 : i1 to i32
    %c0_i32_0 = arith.constant 0 : i32
    %2 = arith.cmpi ne, %1, %c0_i32_0 : i32
    scf.if %2 {
      %cst_27 = arith.constant 0.000000e+00 : f32
      %44 = vector.broadcast %cst_27 : f32 to vector<8x128xf32>
      %c0_28 = arith.constant 0 : index
      %c0_29 = arith.constant 0 : index
      %45 = vector.load %arg11[%c0_28, %c0_29] : memref<8x128xf32, #tpu.memory_space<vmem>>, vector<8x128xf32>
      tpu.vector_store %arg11[%c0_28, %c0_29], %44 {strides = array<i32>} : memref<8x128xf32, #tpu.memory_space<vmem>>, vector<8x128xf32>,
    } else {
    }
    %c0 = arith.constant 0 : index
    %c0_1 = arith.constant 0 : index
    %3 = vector.load %arg2[%c0, %c0_1] : memref<8x32xf32, #tpu.memory_space<vmem>>, vector<8x32xf32>
    %c0_2 = arith.constant 0 : index
    %c0_3 = arith.constant 0 : index
    %4 = vector.load %arg3[%c0_2, %c0_3] : memref<8x128xf32, #tpu.memory_space<vmem>>, vector<8x128xf32>
    %c0_4 = arith.constant 0 : index
    %c0_5 = arith.constant 0 : index
    %5 = vector.load %arg4[%c0_4, %c0_5] : memref<1x128xf32, #tpu.memory_space<vmem>>, vector<1x128xf32>
    %c0_6 = arith.constant 0 : index
    %c0_7 = arith.constant 0 : index
    %6 = vector.load %arg5[%c0_6, %c0_7] : memref<1x128xf32, #tpu.memory_space<vmem>>, vector<1x128xf32>
    %c0_8 = arith.constant 0 : index
    %c0_9 = arith.constant 0 : index
    %7 = vector.load %arg6[%c0_8, %c0_9] : memref<32x32xf32, #tpu.memory_space<vmem>>, vector<32x32xf32>
    %cst = arith.constant dense<0.000000e+00> : vector<8x32xf32>
    %8 = tpu.matmul %3, %7, %cst {dimension_numbers = #tpu.dot_dimension_numbers<[1], [0], [0], [1], [0, 0, 1, 1], [], []>} : vector<8x32xf32>, vector<32x32xf32>, vector<8x32xf32> -> vector<8x32xf32>
    %c0_10 = arith.constant 0 : index
    %c0_11 = arith.constant 0 : index
    %9 = vector.load %arg7[%c0_10, %c0_11] : memref<1x32xf32, #tpu.memory_space<vmem>>, vector<1x32xf32>
    %10 = vector.broadcast %9 : vector<1x32xf32> to vector<8x32xf32>
    %11 = arith.addf %8, %10 : vector<8x32xf32>
    %cst_12 = arith.constant 0.000000e+00 : f32
    %12 = vector.broadcast %cst_12 : f32 to vector<8x32xf32>
    %13 = arith.maximumf %11, %12 : vector<8x32xf32>
    %c0_13 = arith.constant 0 : index
    %c0_14 = arith.constant 0 : index
    %14 = vector.load %arg8[%c0_13, %c0_14] : memref<32x256xf32, #tpu.memory_space<vmem>>, vector<32x256xf32>
    %cst_15 = arith.constant dense<0.000000e+00> : vector<8x256xf32>
    %15 = tpu.matmul %13, %14, %cst_15 {dimension_numbers = #tpu.dot_dimension_numbers<[1], [0], [0], [1], [0, 0, 1, 1], [], []>} : vector<8x32xf32>, vector<32x256xf32>, vector<8x256xf32> -> vector<8x256xf32>
    %c0_16 = arith.constant 0 : index
    %c0_17 = arith.constant 0 : index
    %16 = vector.load %arg9[%c0_16, %c0_17] : memref<1x256xf32, #tpu.memory_space<vmem>>, vector<1x256xf32>
    %17 = vector.broadcast %16 : vector<1x256xf32> to vector<8x256xf32>
    %18 = arith.addf %15, %17 : vector<8x256xf32>
    %19 = vector.extract_strided_slice %18 {offsets = [0, 0], sizes = [8, 128], strides = [1, 1]} : vector<8x256xf32> to vector<8x128xf32>
    %20 = vector.extract_strided_slice %18 {offsets = [0, 128], sizes = [8, 128], strides = [1, 1]} : vector<8x256xf32> to vector<8x128xf32>
    %21 = math.tanh %20 : vector<8x128xf32>
    %cst_18 = arith.constant 0.000000e+00 : f32
    %22 = vector.broadcast %cst_18 : f32 to vector<8x128xf32>
    %23 = arith.subf %22, %21 : vector<8x128xf32>
    %24 = math.exp %23 : vector<8x128xf32>
    %25 = vector.broadcast %5 : vector<1x128xf32> to vector<8x128xf32>
    %26 = arith.subf %4, %25 : vector<8x128xf32>
    %27 = vector.broadcast %5 : vector<1x128xf32> to vector<8x128xf32>
    %28 = arith.subf %19, %27 : vector<8x128xf32>
    %cst_19 = arith.constant 2.000000e+00 : f32
    %29 = vector.broadcast %cst_19 : f32 to vector<8x128xf32>
    %30 = arith.mulf %29, %28 : vector<8x128xf32>
    %31 = arith.subf %26, %30 : vector<8x128xf32>
    %32 = arith.mulf %26, %31 : vector<8x128xf32>
    %33 = vector.broadcast %6 : vector<1x128xf32> to vector<8x128xf32>
    %34 = arith.subf %32, %33 : vector<8x128xf32>
    %35 = arith.mulf %24, %34 : vector<8x128xf32>
    %c0_20 = arith.constant 0 : index
    %c0_21 = arith.constant 0 : index
    %36 = vector.load %arg11[%c0_20, %c0_21] : memref<8x128xf32, #tpu.memory_space<vmem>>, vector<8x128xf32>
    %37 = vector.shape_cast %35 : vector<8x128xf32> to vector<1x8x128xf32>
    %cst_22 = arith.constant dense<0.000000e+00> : vector<8x128xf32>
    %38 = vector.multi_reduction <add>, %37, %cst_22 [0] : vector<1x8x128xf32> to vector<8x128xf32>
    %39 = arith.addf %36, %38 : vector<8x128xf32>
    %c0_23 = arith.constant 0 : index
    %c0_24 = arith.constant 0 : index
    %40 = vector.load %arg11[%c0_23, %c0_24] : memref<8x128xf32, #tpu.memory_space<vmem>>, vector<8x128xf32>
    tpu.vector_store %arg11[%c0_23, %c0_24], %39 {strides = array<i32>} : memref<8x128xf32, #tpu.memory_space<vmem>>, vector<8x128xf32>,
    %c0_i32_25 = arith.constant 0 : i32
    %41 = arith.cmpi eq, %arg1, %c0_i32_25 : i32
    %42 = arith.extui %41 : i1 to i32
    %c0_i32_26 = arith.constant 0 : i32
    %43 = arith.cmpi ne, %42, %c0_i32_26 : i32
    scf.if %43 {
      %c0_27 = arith.constant 0 : index
      %c0_28 = arith.constant 0 : index
      %44 = vector.load %arg11[%c0_27, %c0_28] : memref<8x128xf32, #tpu.memory_space<vmem>>, vector<8x128xf32>
      %c0_29 = arith.constant 0 : index
      %c0_30 = arith.constant 0 : index
      %c0_31 = arith.constant 0 : index
      %45 = vector.load %arg10[%c0_29, %c0_30, %c0_31] : memref<1x8x128xf32, #tpu.memory_space<vmem>>, vector<1x8x128xf32>
      %46 = vector.shape_cast %45 : vector<1x8x128xf32> to vector<8x128xf32>
      %47 = vector.shape_cast %44 : vector<8x128xf32> to vector<1x8x128xf32>
      tpu.vector_store %arg10[%c0_29, %c0_30, %c0_31], %47 {strides = array<i32>} : memref<1x8x128xf32, #tpu.memory_space<vmem>>, vector<1x8x128xf32>,
    } else {
    }
    return
  }
  func.func @transform_0(%arg0: i32, %arg1: i32) -> (i32, i32) {
    %c1_i32 = arith.constant 1 : i32
    %0 = arith.muli %arg0, %c1_i32 : i32
    %1 = arith.addi %0, %arg1 : i32
    %c0_i32 = arith.constant 0 : i32
    %2 = arith.minsi %1, %c0_i32 : i32
    %c0_i32_0 = arith.constant 0 : i32
    %c0_i32_1 = arith.constant 0 : i32
    return %2, %c0_i32_0 : i32, i32
  }
  func.func @transform_1(%arg0: i32, %arg1: i32) -> (i32, i32) {
    %c1_i32 = arith.constant 1 : i32
    %0 = arith.muli %arg0, %c1_i32 : i32
    %1 = arith.addi %0, %arg1 : i32
    %c0_i32 = arith.constant 0 : i32
    %2 = arith.minsi %1, %c0_i32 : i32
    %c0_i32_0 = arith.constant 0 : i32
    %c0_i32_1 = arith.constant 0 : i32
    return %2, %c0_i32_0 : i32, i32
  }
  func.func @transform_2(%arg0: i32, %arg1: i32) -> (i32, i32) {
    %c0_i32 = arith.constant 0 : i32
    %c0_i32_0 = arith.constant 0 : i32
    %c0_i32_1 = arith.constant 0 : i32
    return %c0_i32, %c0_i32_0 : i32, i32
  }
  func.func @transform_3(%arg0: i32, %arg1: i32) -> (i32, i32) {
    %c0_i32 = arith.constant 0 : i32
    %c0_i32_0 = arith.constant 0 : i32
    %c0_i32_1 = arith.constant 0 : i32
    return %c0_i32, %c0_i32_0 : i32, i32
  }
  func.func @transform_4(%arg0: i32, %arg1: i32) -> (i32, i32) {
    %c0_i32 = arith.constant 0 : i32
    %c0_i32_0 = arith.constant 0 : i32
    %c0_i32_1 = arith.constant 0 : i32
    return %c0_i32, %c0_i32_0 : i32, i32
  }
  func.func @transform_5(%arg0: i32, %arg1: i32) -> (i32, i32) {
    %c0_i32 = arith.constant 0 : i32
    %c0_i32_0 = arith.constant 0 : i32
    %c0_i32_1 = arith.constant 0 : i32
    return %c0_i32, %c0_i32_0 : i32, i32
  }
  func.func @transform_6(%arg0: i32, %arg1: i32) -> (i32, i32) {
    %c0_i32 = arith.constant 0 : i32
    %c0_i32_0 = arith.constant 0 : i32
    %c0_i32_1 = arith.constant 0 : i32
    return %c0_i32, %c0_i32_0 : i32, i32
  }
  func.func @transform_7(%arg0: i32, %arg1: i32) -> (i32, i32) {
    %c0_i32 = arith.constant 0 : i32
    %c0_i32_0 = arith.constant 0 : i32
    %c0_i32_1 = arith.constant 0 : i32
    return %c0_i32, %c0_i32_0 : i32, i32
  }
  func.func @transform_8(%arg0: i32, %arg1: i32) -> (i32, i32, i32) {
    %c0_i32 = arith.constant 0 : i32
    %c0_i32_0 = arith.constant 0 : i32
    %c0_i32_1 = arith.constant 0 : i32
    return %arg0, %c0_i32, %c0_i32_0 : i32, i32, i32
  }
}

</mosaic_0001>

<llo_original>
// kernel: tpu_custom_call.1
$region0: #{tpu_custom_call.1}
  #allocation0 [shape = 'u32[]', space=smem, size = 0x4, offset = 0x4, fixed_abs, tag = 'smem constant byte address 0x4 - core index']
  #allocation1 [shape = 'u32[144,128]{1,0:T(1,128)}', space=vmem, size = 0x12000, scoped, tag = 'internal scratch']
  #allocation2 [shape = 'f32[8,128]{1,0:T(8,128)}', space=vmem, size = 0x1000, scoped, tag = 'scratch operand']
  %s0 = inlined_call_operand.hbm [shape: f32[8,32], index: 0, kind: input, shape index: {}]
  %s1 = inlined_call_operand.hbm [shape: f32[8,128], index: 1, kind: input, shape index: {}]
  %s2 = inlined_call_operand.vmem [shape: f32[1,128], index: 2, kind: input, shape index: {}]
  %s3 = inlined_call_operand.vmem [shape: f32[1,128], index: 3, kind: input, shape index: {}]
  %s4 = inlined_call_operand.hbm [shape: f32[32,32], index: 4, kind: input, shape index: {}]
  %s5 = inlined_call_operand.vmem [shape: f32[1,32], index: 5, kind: input, shape index: {}]
  %s6 = inlined_call_operand.hbm [shape: f32[32,256], index: 6, kind: input, shape index: {}]
  %s7 = inlined_call_operand.vmem [shape: f32[1,256], index: 7, kind: input, shape index: {}]
  %s8 = inlined_call_operand.hbm [shape: f32[1,8,128], index: 8, kind: output, shape index: {}]
  %s9 = sld [smem:[#allocation0]]
  $region66: #{tpu_custom_call.1} parent=0
    _
  %s11 = ssub.s32 1, %s9
  %s12 = scalar_select 0, %s11, %s9
  $region1: #{tpu_custom_call.1} parent=0
    #allocation3 [shape = 'u8[4096]{0}', space=vmem, size = 0x1000, scoped, tag = 'input window, operand 0, single buffered']
    #allocation4 [shape = 's32[1]{0}', space=sflag, size = 0x4, scoped, tag = 'scoped memory for tpu_custom_call.1']
    #allocation5 [shape = 's32[1]{0}', space=sflag, size = 0x4, scoped, tag = 'scoped memory for tpu_custom_call.1']
    #allocation6 [shape = 'u8[4096]{0}', space=vmem, size = 0x1000, scoped, tag = 'input window, operand 1, single buffered']
    #allocation7 [shape = 's32[1]{0}', space=sflag, size = 0x4, scoped, tag = 'scoped memory for tpu_custom_call.1']
    #allocation8 [shape = 'u8[16384]{0}', space=vmem, size = 0x4000, scoped, tag = 'input window, operand 4, single buffered']
    #allocation9 [shape = 'u8[32768]{0}', space=vmem, size = 0x8000, scoped, tag = 'input window, operand 6, single buffered']
    #allocation10 [shape = 's32[1]{0}', space=sflag, size = 0x4, scoped, tag = 'scoped memory for tpu_custom_call.1']
    #allocation11 [shape = 'u8[4096]{0}', space=vmem, size = 0x1000, scoped, tag = 'output window, operand 0, single buffered']
    %13 = vsyncpa [#allocation4], 0
    %14 = vsyncpa [#allocation7], 0
    %15 = vsyncpa [#allocation10], 0
    %16 = vsyncpa [#allocation5], 0
    // Predicated region
    $region2: #{tpu_custom_call.1} parent=1 // pred_check
      _
    $region3: #{tpu_custom_call.1} parent=1 // pred_check_branch
      %18 = sbr.rel (0) target = $region5
    $region4: #{tpu_custom_call.1} parent=1 // pred_region
      %s19 = sadd.s32 0, 0
      %p20 = scmp.lt.s32.totalorder %s19, 0
      %s21 = scalar_select %p20, %s19, 0
      %s23 = ssub.s32 128, 128
      %24 = vsyncadd [#allocation4], %s23
      %s25 = smul.addr %s21, 128
      %s26 = scalar_lea.hbm %s0, %s25
      %s28 = sshll.u32 [#allocation3], 4
      %s29 = int_to_ptr.vmem [resolvable:$true] %s28
      %31 = dma.hbm_to_vmem [thread:$0]  %s26, 128, %s29, [#allocation4]
    $region5: #{tpu_custom_call.1} parent=1 // pred_fallthru
      _
    // Predicated region
    $region6: #{tpu_custom_call.1} parent=1 // pred_check
      _
    $region7: #{tpu_custom_call.1} parent=1 // pred_check_branch
      %33 = sbr.rel (0) target = $region9
    $region8: #{tpu_custom_call.1} parent=1 // pred_region
      %s34 = sadd.s32 0, 0
      %p35 = scmp.lt.s32.totalorder %s34, 0
      %s36 = scalar_select %p35, %s34, 0
      %s38 = ssub.s32 128, 128
      %39 = vsyncadd [#allocation7], %s38
      %s40 = smul.addr %s36, 128
      %s41 = scalar_lea.hbm %s1, %s40
      %s43 = sshll.u32 [#allocation6], 4
      %s44 = int_to_ptr.vmem [resolvable:$true] %s43
      %46 = dma.hbm_to_vmem [thread:$0]  %s41, 128, %s44, [#allocation7]
    $region9: #{tpu_custom_call.1} parent=1 // pred_fallthru
      _
    // Predicated region
    $region10: #{tpu_custom_call.1} parent=1 // pred_check
      _
    $region11: #{tpu_custom_call.1} parent=1 // pred_check_branch
      %48 = sbr.rel (0) target = $region13
    $region12: #{tpu_custom_call.1} parent=1 // pred_region
      _
    $region13: #{tpu_custom_call.1} parent=1 // pred_fallthru
      _
    // Predicated region
    $region14: #{tpu_custom_call.1} parent=1 // pred_check
      _
    $region15: #{tpu_custom_call.1} parent=1 // pred_check_branch
      %50 = sbr.rel (0) target = $region17
    $region16: #{tpu_custom_call.1} parent=1 // pred_region
      _
    $region17: #{tpu_custom_call.1} parent=1 // pred_fallthru
      _
    // Predicated region
    $region18: #{tpu_custom_call.1} parent=1 // pred_check
      _
    $region19: #{tpu_custom_call.1} parent=1 // pred_check_branch
      %52 = sbr.rel (0) target = $region21
    $region20: #{tpu_custom_call.1} parent=1 // pred_region
      %s54 = ssub.s32 512, 512
      %55 = vsyncadd [#allocation7], %s54
      %s56 = sshll.u32 [#allocation8], 4
      %s57 = int_to_ptr.vmem [resolvable:$true] %s56
      %62 = dma.hbm_to_vmem [thread:$0]  %s4, 512, %s57, [#allocation7], 128, 128, 8
    $region21: #{tpu_custom_call.1} parent=1 // pred_fallthru
      _
    // Predicated region
    $region22: #{tpu_custom_call.1} parent=1 // pred_check
      _
    $region23: #{tpu_custom_call.1} parent=1 // pred_check_branch
      %64 = sbr.rel (0) target = $region25
    $region24: #{tpu_custom_call.1} parent=1 // pred_region
      _
    $region25: #{tpu_custom_call.1} parent=1 // pred_fallthru
      _
    // Predicated region
    $region26: #{tpu_custom_call.1} parent=1 // pred_check
      _
    $region27: #{tpu_custom_call.1} parent=1 // pred_check_branch
      %66 = sbr.rel (0) target = $region29
    $region28: #{tpu_custom_call.1} parent=1 // pred_region
      %s68 = ssub.s32 1024, 1024
      %69 = vsyncadd [#allocation10], %s68
      %s70 = sshll.u32 [#allocation9], 4
      %s71 = int_to_ptr.vmem [resolvable:$true] %s70
      %76 = dma.hbm_to_vmem [thread:$0]  %s6, 1024, %s71, [#allocation10], 256, 256, 16
    $region29: #{tpu_custom_call.1} parent=1 // pred_fallthru
      _
    // Predicated region
    $region30: #{tpu_custom_call.1} parent=1 // pred_check
      _
    $region31: #{tpu_custom_call.1} parent=1 // pred_check_branch
      %78 = sbr.rel (0) target = $region33
    $region32: #{tpu_custom_call.1} parent=1 // pred_region
      _
    $region33: #{tpu_custom_call.1} parent=1 // pred_fallthru
      _
    // Predicated region
    $region34: #{tpu_custom_call.1} parent=1 // pred_check
      _
    $region35: #{tpu_custom_call.1} parent=1 // pred_check_branch
      %80 = sbr.rel (0) target = $region37
    $region36: #{tpu_custom_call.1} parent=1 // pred_region
      %81 = dma.done [#allocation4], 128
    $region37: #{tpu_custom_call.1} parent=1 // pred_fallthru
      _
    // Predicated region
    $region38: #{tpu_custom_call.1} parent=1 // pred_check
      _
    $region39: #{tpu_custom_call.1} parent=1 // pred_check_branch
      %83 = sbr.rel (0) target = $region41
    $region40: #{tpu_custom_call.1} parent=1 // pred_region
      %84 = dma.done [#allocation7], 128
    $region41: #{tpu_custom_call.1} parent=1 // pred_fallthru
      _
    // Predicated region
    $region42: #{tpu_custom_call.1} parent=1 // pred_check
      _
    $region43: #{tpu_custom_call.1} parent=1 // pred_check_branch
      %86 = sbr.rel (0) target = $region45
    $region44: #{tpu_custom_call.1} parent=1 // pred_region
      %87 = dma.done [#allocation7], 512
    $region45: #{tpu_custom_call.1} parent=1 // pred_fallthru
      _
    // Predicated region
    $region46: #{tpu_custom_call.1} parent=1 // pred_check
      _
    $region47: #{tpu_custom_call.1} parent=1 // pred_check_branch
      %89 = sbr.rel (0) target = $region49
    $region48: #{tpu_custom_call.1} parent=1 // pred_region
      %90 = dma.done [#allocation10], 1024
    $region49: #{tpu_custom_call.1} parent=1 // pred_fallthru
      _
    %s91 = sadd.s32 0, 0
    %p92 = scmp.lt.s32.totalorder %s91, 0
    %s93 = scalar_select %p92, %s91, 0
    %s94 = sadd.s32 0, 0
    %p95 = scmp.lt.s32.totalorder %s94, 0
    %s96 = scalar_select %p95, %s94, 0
    %p97 = scmp.eq.s32.totalorder 0, 0
    // Predicated region
    $region50: #{tpu_custom_call.1} parent=1 // pred_check
      %p98 = pneg %p97
    $region51: #{tpu_custom_call.1} parent=1 // pred_check_branch
      %100 = sbr.rel (%p98) target = $region53
    $region52: #{tpu_custom_call.1} parent=1 // pred_region
      %101 = vst [vmem:[#allocation2] sm:$0xff] 0.0
    $region53: #{tpu_custom_call.1} parent=1 // pred_fallthru
      _
    %v102 = vld [vmem:[#allocation3] sm:$0xff]
    %v103 = vld [vmem:[#allocation6] sm:$0xff]
    %v104 = vld [vmem:[%s2] sm:$0x1]
    %v105 = vld [vmem:[%s3] sm:$0x1]
    %v106 = vld [vmem:[#allocation8] sm:$0xff]
    %v107 = vld [vmem:[#allocation8 + $0x8] sm:$0xff]
    %v108 = vld [vmem:[#allocation8 + $0x10] sm:$0xff]
    %v109 = vld [vmem:[#allocation8 + $0x18] sm:$0xff]
    %v110 = vld [vmem:[%s5] sm:$0x1]
    %v112 = vlaneseq
    %v113 = vshrl.u32 %v112, 7
    %v114 = vsub.s32 0, %v113
    %v115 = vrot.slane %v110, %v114
    %vm117 = vcmask 261120
    %v119 = vsel %vm117, %v102, 0
    %121 = vmatprep.subr.mxu0 0.0
    %122 = vmatpush1.msra.mxu0 %v106
    %123 = vmatprep.subr.mxu0 0.0
    %124 = vmatpush1.msra.mxu0 %v107
    %125 = vmatprep.subr.mxu0 0.0
    %126 = vmatpush1.msra.mxu0 %v108
    %127 = vmatprep.subr.mxu0 0.0
    %128 = vmatpush1.msra.mxu0 %v109
    %129 = vmatprep.subr.mxu0 0.0
    %130 = vmatpush1.msra.mxu0 0.0
    %131 = vmatprep.subr.mxu0 0.0
    %132 = vmatpush1.msra.mxu0 0.0
    %133 = vmatprep.subr.mxu0 0.0
    %134 = vmatpush1.msra.mxu0 0.0
    %135 = vmatprep.subr.mxu0 0.0
    %136 = vmatpush1.msra.mxu0 0.0
    %137 = vmatprep.subr.mxu0 0.0
    %138 = vmatpush1.msra.mxu0 0.0
    %139 = vmatprep.subr.mxu0 0.0
    %140 = vmatpush1.msra.mxu0 0.0
    %141 = vmatprep.subr.mxu0 0.0
    %142 = vmatpush1.msra.mxu0 0.0
    %143 = vmatprep.subr.mxu0 0.0
    %144 = vmatpush1.msra.mxu0 0.0
    %145 = vmatprep.subr.mxu0 0.0
    %146 = vmatpush1.msra.mxu0 0.0
    %147 = vmatprep.subr.mxu0 0.0
    %148 = vmatpush1.msra.mxu0 0.0
    %149 = vmatprep.subr.mxu0 0.0
    %150 = vmatpush1.msra.mxu0 0.0
    %151 = vmatprep.subr.mxu0 0.0
    %152 = vmatpush1.msra.mxu0 0.0
    %153 = vmatprep.subr.mxu0 0.0
    %154 = vmatpush1.msra.mxu0 0.0
    %155 = vmatprep.subr.mxu0 0.0
    %156 = vmatpush1.msra.mxu0 0.0
    %157 = vmatprep.subr.mxu0 0.0
    %158 = vmatpush1.msra.mxu0 0.0
    %159 = vmatprep.subr.mxu0 0.0
    %160 = vmatpush1.msra.mxu0 0.0
    %161 = vmatprep.subr.mxu0 0.0
    %162 = vmatpush1.msra.mxu0 0.0
    %163 = vmatprep.subr.mxu0 0.0
    %164 = vmatpush1.msra.mxu0 0.0
    %165 = vmatprep.subr.mxu0 0.0
    %166 = vmatpush1.msra.mxu0 0.0
    %167 = vmatprep.subr.mxu0 0.0
    %168 = vmatpush1.msra.mxu0 0.0
    %169 = vmatprep.subr.mxu0 0.0
    %170 = vmatpush1.msra.mxu0 0.0
    %171 = vmatprep.subr.mxu0 0.0
    %172 = vmatpush1.msra.mxu0 0.0
    %173 = vmatprep.subr.mxu0 0.0
    %174 = vmatpush1.msra.mxu0 0.0
    %175 = vmatprep.subr.mxu0 0.0
    %176 = vmatpush1.msra.mxu0 0.0
    %177 = vmatprep.subr.mxu0 0.0
    %178 = vmatpush1.msra.mxu0 0.0
    %179 = vmatprep.subr.mxu0 0.0
    %180 = vmatpush1.msra.mxu0 0.0
    %181 = vmatprep.subr.mxu0 0.0
    %182 = vmatpush1.msra.mxu0 0.0
    %183 = vmatprep.subr.mxu0 0.0
    %184 = vmatpush1.msra.mxu0 0.0
    %185 = vmatprep.mubr.f32.mxu0 0.0
    %186 = vmatmul.mubr.f32.gmra.mrb[0].mxu0 %v119
    %v187 = vpop.f32.mrb[0].mxu0
    %v188 = vadd.f32 %v115, %v187
    %v189 = vpop.f32.mrb[0].mxu0
    %190 = vdwg.mxu0
    %v191 = vmax.f32 %v188, 0.0
    %v192 = vld [vmem:[#allocation9] sm:$0xff]
    %v193 = vld [vmem:[#allocation9 + $0x8] sm:$0xff]
    %v194 = vld [vmem:[#allocation9 + $0x10] sm:$0xff]
    %v195 = vld [vmem:[#allocation9 + $0x18] sm:$0xff]
    %v196 = vld [vmem:[#allocation9 + $0x20] sm:$0xff]
    %v197 = vld [vmem:[#allocation9 + $0x28] sm:$0xff]
    %v198 = vld [vmem:[#allocation9 + $0x30] sm:$0xff]
    %v199 = vld [vmem:[#allocation9 + $0x38] sm:$0xff]
    %v200 = vld [vmem:[%s7] sm:$0x3]
    %v202 = vlaneseq
    %v203 = vshrl.u32 %v202, 7
    %v204 = vsub.s32 0, %v203
    %v205 = vrot.slane %v200, %v204
    %v206 = vlaneseq
    %v207 = vshrl.u32 %v206, 7
    %v208 = vsub.s32 1, %v207
    %v209 = vrot.slane %v200, %v208
    %v213 = vsel %vm117, %v191, 0
    %215 = vmatprep.subr.mxu0 %v193
    %216 = vmatpush1.msra.mxu0 %v192
    %217 = vmatprep.subr.mxu0 %v195
    %218 = vmatpush1.msra.mxu0 %v194
    %219 = vmatprep.subr.mxu0 %v197
    %220 = vmatpush1.msra.mxu0 %v196
    %221 = vmatprep.subr.mxu0 %v199
    %222 = vmatpush1.msra.mxu0 %v198
    %223 = vmatprep.subr.mxu0 0.0
    %224 = vmatpush1.msra.mxu0 0.0
    %225 = vmatprep.subr.mxu0 0.0
    %226 = vmatpush1.msra.mxu0 0.0
    %227 = vmatprep.subr.mxu0 0.0
    %228 = vmatpush1.msra.mxu0 0.0
    %229 = vmatprep.subr.mxu0 0.0
    %230 = vmatpush1.msra.mxu0 0.0
    %231 = vmatprep.subr.mxu0 0.0
    %232 = vmatpush1.msra.mxu0 0.0
    %233 = vmatprep.subr.mxu0 0.0
    %234 = vmatpush1.msra.mxu0 0.0
    %235 = vmatprep.subr.mxu0 0.0
    %236 = vmatpush1.msra.mxu0 0.0
    %237 = vmatprep.subr.mxu0 0.0
    %238 = vmatpush1.msra.mxu0 0.0
    %239 = vmatprep.subr.mxu0 0.0
    %240 = vmatpush1.msra.mxu0 0.0
    %241 = vmatprep.subr.mxu0 0.0
    %242 = vmatpush1.msra.mxu0 0.0
    %243 = vmatprep.subr.mxu0 0.0
    %244 = vmatpush1.msra.mxu0 0.0
    %245 = vmatprep.subr.mxu0 0.0
    %246 = vmatpush1.msra.mxu0 0.0
    %247 = vmatprep.subr.mxu0 0.0
    %248 = vmatpush1.msra.mxu0 0.0
    %249 = vmatprep.subr.mxu0 0.0
    %250 = vmatpush1.msra.mxu0 0.0
    %251 = vmatprep.subr.mxu0 0.0
    %252 = vmatpush1.msra.mxu0 0.0
    %253 = vmatprep.subr.mxu0 0.0
    %254 = vmatpush1.msra.mxu0 0.0
    %255 = vmatprep.subr.mxu0 0.0
    %256 = vmatpush1.msra.mxu0 0.0
    %257 = vmatprep.subr.mxu0 0.0
    %258 = vmatpush1.msra.mxu0 0.0
    %259 = vmatprep.subr.mxu0 0.0
    %260 = vmatpush1.msra.mxu0 0.0
    %261 = vmatprep.subr.mxu0 0.0
    %262 = vmatpush1.msra.mxu0 0.0
    %263 = vmatprep.subr.mxu0 0.0
    %264 = vmatpush1.msra.mxu0 0.0
    %265 = vmatprep.subr.mxu0 0.0
    %266 = vmatpush1.msra.mxu0 0.0
    %267 = vmatprep.subr.mxu0 0.0
    %268 = vmatpush1.msra.mxu0 0.0
    %269 = vmatprep.subr.mxu0 0.0
    %270 = vmatpush1.msra.mxu0 0.0
    %271 = vmatprep.subr.mxu0 0.0
    %272 = vmatpush1.msra.mxu0 0.0
    %273 = vmatprep.subr.mxu0 0.0
    %274 = vmatpush1.msra.mxu0 0.0
    %275 = vmatprep.subr.mxu0 0.0
    %276 = vmatpush1.msra.mxu0 0.0
    %277 = vmatprep.subr.mxu0 0.0
    %278 = vmatpush1.msra.mxu0 0.0
    %279 = vmatprep.mubr.f32.mxu0 0.0
    %280 = vmatmul.mubr.f32.gmra.mrb[0].mxu0 %v213
    %v281 = vpop.f32.mrb[0].mxu0
    %v282 = vadd.f32 %v205, %v281
    %v283 = vpop.f32.mrb[0].mxu0
    %v284 = vadd.f32 %v209, %v283
    %285 = vdwg.mxu0
    %v286 = vtanh.pop %v284
    %v287 = vsub.f32 0.0, %v286
    %v288 = vmul.f32 %v287, 1.442695
    %v289 = vpow.pop %v288
    %v291 = vlaneseq
    %v292 = vshrl.u32 %v291, 7
    %v293 = vsub.s32 0, %v292
    %v294 = vrot.slane %v104, %v293
    %v296 = vsub.f32 %v103, %v294
    %v297 = vsub.f32 %v282, %v294
    %v298 = vmul.f32 %v297, 2.0
    %v299 = vsub.f32 %v296, %v298
    %v300 = vmul.f32 %v296, %v299
    %v302 = vlaneseq
    %v303 = vshrl.u32 %v302, 7
    %v304 = vsub.s32 0, %v303
    %v305 = vrot.slane %v105, %v304
    %v307 = vsub.f32 %v300, %v305
    %v308 = vmul.f32 %v289, %v307
    %v309 = vld [vmem:[#allocation2] sm:$0xff]
    %v310 = vadd.f32 %v308, 0.0
    %v311 = vadd.f32 %v309, %v310
    %312 = vst [vmem:[#allocation2] sm:$0xff] %v311
    // Predicated region
    $region54: #{tpu_custom_call.1} parent=1 // pred_check
      %p313 = pneg %p97
    $region55: #{tpu_custom_call.1} parent=1 // pred_check_branch
      %315 = sbr.rel (%p313) target = $region57
    $region56: #{tpu_custom_call.1} parent=1 // pred_region
      %v316 = vld [vmem:[#allocation2] sm:$0xff]
      %317 = vst [vmem:[#allocation11] sm:$0xff] %v316
    $region57: #{tpu_custom_call.1} parent=1 // pred_fallthru
      _
    // Predicated region
    $region58: #{tpu_custom_call.1} parent=1 // pred_check
      _
    $region59: #{tpu_custom_call.1} parent=1 // pred_check_branch
      %319 = sbr.rel (0) target = $region61
    $region60: #{tpu_custom_call.1} parent=1 // pred_region
      %s321 = ssub.s32 128, 128
      %322 = vsyncadd [#allocation5], %s321
      %s324 = sshll.u32 [#allocation11], 4
      %s325 = int_to_ptr.vmem [resolvable:$true] %s324
      %327 = dma.vmem_to_hbm [thread:$0]  %s325, 128, %s8, [#allocation5]
    $region61: #{tpu_custom_call.1} parent=1 // pred_fallthru
      _
    // Predicated region
    $region62: #{tpu_custom_call.1} parent=1 // pred_check
      _
    $region63: #{tpu_custom_call.1} parent=1 // pred_check_branch
      %329 = sbr.rel (0) target = $region65
    $region64: #{tpu_custom_call.1} parent=1 // pred_region
      %330 = dma.done [#allocation5], 128
    $region65: #{tpu_custom_call.1} parent=1 // pred_fallthru
      _
    %331 = vsyncpa [#allocation4], 1
    %332 = vsyncpa [#allocation7], 1
    %333 = vsyncpa [#allocation10], 1
    %334 = vsyncpa [#allocation5], 1

</llo_original>
